<compile_context>
chip_gen: v7x
topology: tpu7x:2x2x1
jax: 0.10.0
libtpu: 0.0.40
codegen_flags: <defaults>
</compile_context>

<pallas_src>
import functools

import jax
import jax.numpy as jnp
from jax.experimental import pallas as pl
from jax.experimental.pallas import tpu as pltpu


_LANE = 128
_MAX_TILE = 2048                        # 512-2048 lanes hits the HBM-roofline plateau
_BLOCK_BUDGET_BYTES = 2 * 1024 * 1024   # per block; 2x(in+out) double-buffered ~= 8 MiB
                                        # (safe under v5e 16 MiB / v6e,v7x 32 MiB scoped VMEM)


def _round_up(a, b):
    return (a + b - 1) // b * b


def _channel_sums(x, C):
    """sum(x) and sum(x*x) over the channel (sublane) axis, in one pass.

    For tiny C (< 8, i.e. padded sublanes) an unrolled chain of VPU adds avoids
    an XLU cross-sublane reduce over mostly-padding sublanes."""
    if C <= 8:
        x0 = x[:, 0:1, :]
        s1 = x0
        s2 = x0 * x0
        for c in range(1, C):
            xc = x[:, c:c + 1, :]
            s1 = s1 + xc
            s2 = s2 + xc * xc
        return s1, s2
    return (jnp.sum(x, axis=1, keepdims=True),
            jnp.sum(x * x, axis=1, keepdims=True))


def _layernorm_cf_kernel(x_ref, w_ref, b_ref, o_ref, *, eps, C):
    # x_ref: (Nb, C, T)   w_ref / b_ref: (1, C, 1)   o_ref: (Nb, C, T)
    x = x_ref[...].astype(jnp.float32)
    s1, s2 = _channel_sums(x, C)                 # fused single pass over the tile
    inv_c = jnp.float32(1.0 / C)
    mean = s1 * inv_c                            # (Nb, 1, T)
    var = s2 * inv_c - mean * mean               # biased variance (matches PyTorch)
    inv = jax.lax.rsqrt(var + eps)
    y = (x - mean) * inv
    w = w_ref[...].astype(jnp.float32)           # (1, C, 1) -> broadcast
    b = b_ref[...].astype(jnp.float32)
    o_ref[...] = (w * y + b).astype(o_ref.dtype)


def layernorm_channels_first(x, weight, bias, eps=1e-6):
    """x: (N, C, H, W). weight, bias: (C,). Returns same shape/dtype as x."""
    N, C, H, W = x.shape
    HW = H * W
    itemsize = jnp.dtype(x.dtype).itemsize

    # ---- spatial tile: largest lane-dense (multiple of 128) tile under the
    # per-block budget, capped at _MAX_TILE; minimize padding, prefer big tiles.
    budget_lanes = max(
        _LANE, (_BLOCK_BUDGET_BYTES // max(1, C * itemsize)) // _LANE * _LANE)
    cap = min(_round_up(HW, _LANE), _MAX_TILE, budget_lanes)
    tile, best_pad = _LANE, None
    for t in range(_LANE, cap + 1, _LANE):
        pad = _round_up(HW, t) - HW
        if best_pad is None or pad <= best_pad:
            tile, best_pad = t, pad
    HW_pad = _round_up(HW, tile)
    grid_j = HW_pad // tile

    # ---- batch several images per grid step when feature maps are small,
    # to amortize the per-grid-step pipeline overhead.
    Nb = 1
    for d in range(N, 0, -1):
        if N % d == 0 and d * C * tile * itemsize <= _BLOCK_BUDGET_BYTES:
            Nb = d
            break
    # keep >= 2 grid steps when possible so v7x's two TensorCores both get work
    if (N // Nb) * grid_j == 1 and N >= 2:
        for d in range(N // 2, 0, -1):
            if N % d == 0:
                Nb = d
                break
    grid_n = N // Nb

    x2 = x.reshape(N, C, HW)
    if HW_pad != HW:
        x2 = jnp.pad(x2, ((0, 0), (0, 0), (0, HW_pad - HW)))
    w2 = weight.reshape(1, C, 1).astype(jnp.float32)
    b2 = bias.reshape(1, C, 1).astype(jnp.float32)

    # longer grid axis first so megacore sharding splits evenly
    if grid_j >= grid_n:
        grid = (grid_j, grid_n)
        xo_map = lambda j, n: (n, 0, j)
    else:
        grid = (grid_n, grid_j)
        xo_map = lambda n, j: (n, 0, j)
    wb_map = lambda a, b: (0, 0, 0)

    kernel = functools.partial(_layernorm_cf_kernel, eps=eps, C=C)

    out = pl.pallas_call(
        kernel,
        out_shape=jax.ShapeDtypeStruct((N, C, HW_pad), x.dtype),
        grid_spec=pltpu.PrefetchScalarGridSpec(
            num_scalar_prefetch=0,
            grid=grid,
            in_specs=[
                pl.BlockSpec((Nb, C, tile), xo_map),
                pl.BlockSpec((1, C, 1), wb_map),   # resident in VMEM
                pl.BlockSpec((1, C, 1), wb_map),   # resident in VMEM
            ],
            out_specs=pl.BlockSpec((Nb, C, tile), xo_map),
        ),
        compiler_params=pltpu.CompilerParams(
            dimension_semantics=("parallel", "parallel"),
        ),
    )(x2, w2, b2)

    if HW_pad != HW:
        out = out[:, :, :HW]
    return out.reshape(N, C, H, W)


def _reference(x, weight, bias, eps=1e-6):
    xf = x.astype(jnp.float32)
    u = jnp.mean(xf, axis=1, keepdims=True)
    s = jnp.mean((xf - u) ** 2, axis=1, keepdims=True)
    y = (xf - u) / jnp.sqrt(s + eps)
    return (weight[None, :, None, None] * y + bias[None, :, None, None]).astype(x.dtype)


if __name__ == "__main__":
    key = jax.random.PRNGKey(0)

    # small shape consistent with the module (LayerNorm over channels, NCHW)
    N, C, H, W = 2, 4, 16, 16
    x = jax.random.normal(key, (N, C, H, W), dtype=jnp.float32)
    weight = jnp.ones((C,), dtype=jnp.float32)   # nn.Parameter(torch.ones(C))
    bias = jnp.zeros((C,), dtype=jnp.float32)    # nn.Parameter(torch.zeros(C))

    out = layernorm_channels_first(x, weight, bias, eps=1e-6)
    out = jax.block_until_ready(out)
    ref = _reference(x, weight, bias, eps=1e-6)
    assert jnp.allclose(out, ref, atol=1e-5, rtol=1e-5), "mismatch vs reference"

    # second case exercising the C>=8 reduce path and spatial padding (HW=225)
    k2 = jax.random.PRNGKey(1)
    x2 = jax.random.normal(k2, (2, 16, 15, 15), dtype=jnp.float32)
    w2 = jax.random.normal(jax.random.PRNGKey(2), (16,), dtype=jnp.float32)
    b2 = jax.random.normal(jax.random.PRNGKey(3), (16,), dtype=jnp.float32)
    out2 = jax.block_until_ready(layernorm_channels_first(x2, w2, b2, eps=1e-6))
    ref2 = _reference(x2, w2, b2, eps=1e-6)
    assert jnp.allclose(out2, ref2, atol=1e-5, rtol=1e-5), "mismatch vs reference (padded)"

    print("KERNEL_OK")
</pallas_src>

<mosaic_0001>
module attributes {stable_mosaic.version = 11 : i64} {
  func.func @_layernorm_cf_kernel(%arg0: i32, %arg1: i32, %arg2: memref<1x4x256xf32, #tpu.memory_space<vmem>>, %arg3: memref<1x4x1xf32, #tpu.memory_space<vmem>>, %arg4: memref<1x4x1xf32, #tpu.memory_space<vmem>>, %arg5: memref<1x4x256xf32, #tpu.memory_space<vmem>>) attributes {dimension_semantics = [#tpu.dimension_semantics<parallel>, #tpu.dimension_semantics<parallel>], iteration_bounds = array<i64: 2, 1>, scalar_prefetch = 0 : i64, scratch_operands = 0 : i64, tpu.core_type = #tpu.core_type<tc>, window_params = [{transform_indices = @transform_0, window_bounds = array<i64: 1, 4, 256>}, {pipeline_mode = #tpu.pipeline_mode<synchronous>, transform_indices = @transform_1, window_bounds = array<i64: 1, 4, 1>}, {pipeline_mode = #tpu.pipeline_mode<synchronous>, transform_indices = @transform_2, window_bounds = array<i64: 1, 4, 1>}, {transform_indices = @transform_3, window_bounds = array<i64: 1, 4, 256>}]} {
    %c0 = arith.constant 0 : index
    %c0_0 = arith.constant 0 : index
    %c0_1 = arith.constant 0 : index
    %0 = vector.load %arg2[%c0, %c0_0, %c0_1] : memref<1x4x256xf32, #tpu.memory_space<vmem>>, vector<1x4x256xf32>
    %1 = vector.extract_strided_slice %0 {offsets = [0, 0, 0], sizes = [1, 1, 256], strides = [1, 1, 1]} : vector<1x4x256xf32> to vector<1x1x256xf32>
    %2 = arith.mulf %1, %1 : vector<1x1x256xf32>
    %3 = vector.extract_strided_slice %0 {offsets = [0, 1, 0], sizes = [1, 1, 256], strides = [1, 1, 1]} : vector<1x4x256xf32> to vector<1x1x256xf32>
    %4 = arith.addf %1, %3 : vector<1x1x256xf32>
    %5 = arith.mulf %3, %3 : vector<1x1x256xf32>
    %6 = arith.addf %2, %5 : vector<1x1x256xf32>
    %7 = vector.extract_strided_slice %0 {offsets = [0, 2, 0], sizes = [1, 1, 256], strides = [1, 1, 1]} : vector<1x4x256xf32> to vector<1x1x256xf32>
    %8 = arith.addf %4, %7 : vector<1x1x256xf32>
    %9 = arith.mulf %7, %7 : vector<1x1x256xf32>
    %10 = arith.addf %6, %9 : vector<1x1x256xf32>
    %11 = vector.extract_strided_slice %0 {offsets = [0, 3, 0], sizes = [1, 1, 256], strides = [1, 1, 1]} : vector<1x4x256xf32> to vector<1x1x256xf32>
    %12 = arith.addf %8, %11 : vector<1x1x256xf32>
    %13 = arith.mulf %11, %11 : vector<1x1x256xf32>
    %14 = arith.addf %10, %13 : vector<1x1x256xf32>
    %cst = arith.constant 2.500000e-01 : f32
    %15 = vector.broadcast %cst : f32 to vector<1x1x256xf32>
    %16 = arith.mulf %12, %15 : vector<1x1x256xf32>
    %cst_2 = arith.constant 2.500000e-01 : f32
    %17 = vector.broadcast %cst_2 : f32 to vector<1x1x256xf32>
    %18 = arith.mulf %14, %17 : vector<1x1x256xf32>
    %19 = arith.mulf %16, %16 : vector<1x1x256xf32>
    %20 = arith.subf %18, %19 : vector<1x1x256xf32>
    %cst_3 = arith.constant 9.99999997E-7 : f32
    %21 = vector.broadcast %cst_3 : f32 to vector<1x1x256xf32>
    %22 = arith.addf %20, %21 : vector<1x1x256xf32>
    %23 = math.rsqrt %22 : vector<1x1x256xf32>
    %24 = vector.broadcast %16 : vector<1x1x256xf32> to vector<1x4x256xf32>
    %25 = arith.subf %0, %24 : vector<1x4x256xf32>
    %26 = vector.broadcast %23 : vector<1x1x256xf32> to vector<1x4x256xf32>
    %27 = arith.mulf %25, %26 : vector<1x4x256xf32>
    %c0_4 = arith.constant 0 : index
    %c0_5 = arith.constant 0 : index
    %c0_6 = arith.constant 0 : index
    %28 = vector.load %arg3[%c0_4, %c0_5, %c0_6] : memref<1x4x1xf32, #tpu.memory_space<vmem>>, vector<1x4x1xf32>
    %c0_7 = arith.constant 0 : index
    %c0_8 = arith.constant 0 : index
    %c0_9 = arith.constant 0 : index
    %29 = vector.load %arg4[%c0_7, %c0_8, %c0_9] : memref<1x4x1xf32, #tpu.memory_space<vmem>>, vector<1x4x1xf32>
    %30 = vector.broadcast %28 : vector<1x4x1xf32> to vector<1x4x256xf32>
    %31 = arith.mulf %30, %27 : vector<1x4x256xf32>
    %32 = vector.broadcast %29 : vector<1x4x1xf32> to vector<1x4x256xf32>
    %33 = arith.addf %31, %32 : vector<1x4x256xf32>
    %c0_10 = arith.constant 0 : index
    %c0_11 = arith.constant 0 : index
    %c0_12 = arith.constant 0 : index
    %34 = vector.load %arg5[%c0_10, %c0_11, %c0_12] : memref<1x4x256xf32, #tpu.memory_space<vmem>>, vector<1x4x256xf32>
    tpu.vector_store %arg5[%c0_10, %c0_11, %c0_12], %33 {strides = array<i32>} : memref<1x4x256xf32, #tpu.memory_space<vmem>>, vector<1x4x256xf32>,
    return
  }
  func.func @transform_0(%arg0: i32, %arg1: i32) -> (i32, i32, i32) {
    %c0_i32 = arith.constant 0 : i32
    %c0_i32_0 = arith.constant 0 : i32
    return %arg0, %c0_i32, %arg1 : i32, i32, i32
  }
  func.func @transform_1(%arg0: i32, %arg1: i32) -> (i32, i32, i32) {
    %c0_i32 = arith.constant 0 : i32
    %c0_i32_0 = arith.constant 0 : i32
    %c0_i32_1 = arith.constant 0 : i32
    %c0_i32_2 = arith.constant 0 : i32
    return %c0_i32, %c0_i32_0, %c0_i32_1 : i32, i32, i32
  }
  func.func @transform_2(%arg0: i32, %arg1: i32) -> (i32, i32, i32) {
    %c0_i32 = arith.constant 0 : i32
    %c0_i32_0 = arith.constant 0 : i32
    %c0_i32_1 = arith.constant 0 : i32
    %c0_i32_2 = arith.constant 0 : i32
    return %c0_i32, %c0_i32_0, %c0_i32_1 : i32, i32, i32
  }
  func.func @transform_3(%arg0: i32, %arg1: i32) -> (i32, i32, i32) {
    %c0_i32 = arith.constant 0 : i32
    %c0_i32_0 = arith.constant 0 : i32
    return %arg0, %c0_i32, %arg1 : i32, i32, i32
  }
}

</mosaic_0001>

<llo_original>
// kernel: tpu_custom_call.1
$region0: #{tpu_custom_call.1}
  #allocation0 [shape = 'u32[]', space=smem, size = 0x4, offset = 0x4, fixed_abs, tag = 'smem constant byte address 0x4 - core index']
  #allocation1 [shape = 'u32[144,128]{1,0:T(1,128)}', space=vmem, size = 0x12000, scoped, tag = 'internal scratch']
  %s0 = inlined_call_operand.hbm [shape: f32[2,4,256], index: 0, kind: input, shape index: {}]
  %s1 = inlined_call_operand.vmem [shape: f32[1,4,1], index: 1, kind: input, shape index: {}]
  %s2 = inlined_call_operand.vmem [shape: f32[1,4,1], index: 2, kind: input, shape index: {}]
  %s3 = inlined_call_operand.hbm [shape: f32[2,4,256], index: 3, kind: output, shape index: {}]
  %s4 = sld [smem:[#allocation0]]
  $region49: #{tpu_custom_call.1} parent=0
    _
  %s6 = ssub.s32 1, %s4
  %s7 = scalar_select 0, %s6, %s4
  $region1: #{tpu_custom_call.1} parent=0
    #allocation2 [shape = 'u8[8192]{0}', space=vmem, size = 0x2000, scoped, tag = 'input window, operand 0']
    #allocation3 [shape = 's32[2]{0}', space=sflag, size = 0x8, scoped, tag = 'scoped memory for tpu_custom_call.1']
    #allocation4 [shape = 's32[2]{0}', space=sflag, size = 0x8, scoped, tag = 'scoped memory for tpu_custom_call.1']
    #allocation5 [shape = 'u8[8192]{0}', space=vmem, size = 0x2000, scoped, tag = 'output window, operand 0']
    %8 = vsyncpa [#allocation3], 0
    %s9 = scalar_lea.sflag [#allocation3], 1
    %10 = vsyncpa %s9, 0
    %11 = vsyncpa [#allocation4], 0
    %s12 = scalar_lea.sflag [#allocation4], 1
    %13 = vsyncpa %s12, 0
    loop: start=0, step=1, limit=4
    $region2: #{tpu_custom_call.1} parent=1 // loop_pre_header
      _
    $region3: #{tpu_custom_call.1} parent=1 // loop_header
      %s15 = sphi 0, %s19
      %p16 = scmp.ge.s32.totalorder %s15, 4
      %s22 = sphi 0, %s34
      %s23 = sphi 0, %s30
      %s24 = sphi 0, %s22
      %s25 = sphi 0, %s23
      %s26 = sphi 0, %s24
      %s27 = sphi 0, %s25
      %s39 = sphi 0, %s41
      %s42 = sphi 0, %s39
      %s43 = sphi 0, %s42
      %s59 = sphi 0, %s43
      %s63 = sphi 0, %s63
      %s65 = sphi 0, %s63
      %s66 = sphi 0, %s65
      %s80 = sphi 0, %s66
      %s84 = sphi 0, %s84
      %s86 = sphi 0, %s84
      %s87 = sphi 0, %s86
      %s101 = sphi 0, %s87
      %s109 = sphi 0, %s111
      %s112 = sphi 0, %s109
      %s113 = sphi 0, %s112
      %s129 = sphi 0, %s113
    $region4: #{tpu_custom_call.1} parent=1 // loop_header_branch
      %18 = sbr.rel (%p16) target = $region8
    $region5: #{tpu_custom_call.1} parent=1 // loop_body
      %s20 = ssub.s32 %s15, 1
      %s21 = ssub.s32 %s15, 2
      %s28 = sadd.s32 1, %s23
      %p29 = scmp.ge.s32.totalorder %s28, 1
      %s30 = scalar_select %p29, 0, %s28
      %s31 = sadd.s32 1, %s22
      %s32 = scalar_select %p29, %s31, %s22
      %p33 = scmp.ge.s32.totalorder %s32, 2
      %s34 = scalar_select %p33, 0, %s32
      %s35 = ssub.s32 %s22, %s34
      %s36 = ssub.s32 %s23, %s30
      %s37 = sor.u32 %s35, %s36
      %p38 = scmp.eq.s32.totalorder %s37, 0
      %s40 = sadd.s32 %s39, 1
      %s41 = scalar_select %p38, %s39, %s40
      %p44 = pneg %p38
      %p45 = scmp.eq.s32.totalorder %s15, 1
      %p46 = por %p44, %p45
      %p47 = scmp.ne.s32.totalorder %s39, %s42
      %p48 = scmp.eq.s32.totalorder %s15, 0
      %p49 = por %p47, %p48
      %p50 = scmp.ne.s32.totalorder %s39, %s42
      %p51 = scmp.eq.s32.totalorder %s20, 1
      %p52 = por %p50, %p51
      %p53 = scmp.ne.s32.totalorder %s42, %s43
      %p54 = scmp.eq.s32.totalorder %s20, 0
      %p55 = por %p53, %p54
      %p56 = scmp.ne.s32.totalorder %s42, %s43
      %p57 = scmp.eq.s32.totalorder %s21, 1
      %p58 = por %p56, %p57
      %p60 = scmp.ne.s32.totalorder %s43, %s59
      %p61 = scmp.eq.s32.totalorder %s21, 0
      %p62 = por %p60, %p61
      %s64 = sadd.s32 %s63, 1
      %p67 = scmp.eq.s32.totalorder %s15, 1
      %p68 = scmp.ne.s32.totalorder %s63, %s65
      %p69 = scmp.eq.s32.totalorder %s15, 0
      %p70 = por %p68, %p69
      %p71 = scmp.ne.s32.totalorder %s63, %s65
      %p72 = scmp.eq.s32.totalorder %s20, 1
      %p73 = por %p71, %p72
      %p74 = scmp.ne.s32.totalorder %s65, %s66
      %p75 = scmp.eq.s32.totalorder %s20, 0
      %p76 = por %p74, %p75
      %p77 = scmp.ne.s32.totalorder %s65, %s66
      %p78 = scmp.eq.s32.totalorder %s21, 1
      %p79 = por %p77, %p78
      %p81 = scmp.ne.s32.totalorder %s66, %s80
      %p82 = scmp.eq.s32.totalorder %s21, 0
      %p83 = por %p81, %p82
      %s85 = sadd.s32 %s84, 1
      %p88 = scmp.eq.s32.totalorder %s15, 1
      %p89 = scmp.ne.s32.totalorder %s84, %s86
      %p90 = scmp.eq.s32.totalorder %s15, 0
      %p91 = por %p89, %p90
      %p92 = scmp.ne.s32.totalorder %s84, %s86
      %p93 = scmp.eq.s32.totalorder %s20, 1
      %p94 = por %p92, %p93
      %p95 = scmp.ne.s32.totalorder %s86, %s87
      %p96 = scmp.eq.s32.totalorder %s20, 0
      %p97 = por %p95, %p96
      %p98 = scmp.ne.s32.totalorder %s86, %s87
      %p99 = scmp.eq.s32.totalorder %s21, 1
      %p100 = por %p98, %p99
      %p102 = scmp.ne.s32.totalorder %s87, %s101
      %p103 = scmp.eq.s32.totalorder %s21, 0
      %p104 = por %p102, %p103
      %s105 = ssub.s32 %s22, %s34
      %s106 = ssub.s32 %s23, %s30
      %s107 = sor.u32 %s105, %s106
      %p108 = scmp.eq.s32.totalorder %s107, 0
      %s110 = sadd.s32 %s109, 1
      %s111 = scalar_select %p108, %s109, %s110
      %p114 = pneg %p108
      %p115 = scmp.eq.s32.totalorder %s15, 1
      %p116 = por %p114, %p115
      %p117 = scmp.ne.s32.totalorder %s109, %s112
      %p118 = scmp.eq.s32.totalorder %s15, 0
      %p119 = por %p117, %p118
      %p120 = scmp.ne.s32.totalorder %s109, %s112
      %p121 = scmp.eq.s32.totalorder %s20, 1
      %p122 = por %p120, %p121
      %p123 = scmp.ne.s32.totalorder %s112, %s113
      %p124 = scmp.eq.s32.totalorder %s20, 0
      %p125 = por %p123, %p124
      %p126 = scmp.ne.s32.totalorder %s112, %s113
      %p127 = scmp.eq.s32.totalorder %s21, 1
      %p128 = por %p126, %p127
      %p130 = scmp.ne.s32.totalorder %s113, %s129
      %p131 = scmp.eq.s32.totalorder %s21, 0
      %p132 = por %p130, %p131
      %p133 = scmp.le.s32.totalorder 1, %s15
      %p134 = scmp.lt.s32.totalorder %s15, 3
      %p135 = pnand %p133, %p134
      %p136 = pneg %p135
      // Predicated region
      $region9: #{tpu_custom_call.1} parent=5 // pred_check
        _
      $region10: #{tpu_custom_call.1} parent=5 // pred_check_branch
        %138 = sbr.rel (%p135) target = $region12
      $region11: #{tpu_custom_call.1} parent=5 // pred_region
        %s139 = ssub.s32 %s15, 1
        // Predicated region
        $region13: #{tpu_custom_call.1} parent=11 // pred_check
          %p140 = pneg %p76
        $region14: #{tpu_custom_call.1} parent=11 // pred_check_branch
          %142 = sbr.rel (%p140) target = $region16
        $region15: #{tpu_custom_call.1} parent=11 // pred_region
          _
        $region16: #{tpu_custom_call.1} parent=11 // pred_fallthru
          _
        // Predicated region
        $region17: #{tpu_custom_call.1} parent=11 // pred_check
          %p143 = pneg %p97
        $region18: #{tpu_custom_call.1} parent=11 // pred_check_branch
          %145 = sbr.rel (%p143) target = $region20
        $region19: #{tpu_custom_call.1} parent=11 // pred_region
          _
        $region20: #{tpu_custom_call.1} parent=11 // pred_fallthru
          _
      $region12: #{tpu_custom_call.1} parent=5 // pred_fallthru
        _
      %p146 = scmp.lt.s32.totalorder %s15, 2
      // Predicated region
      $region21: #{tpu_custom_call.1} parent=5 // pred_check
        %p147 = pneg %p146
      $region22: #{tpu_custom_call.1} parent=5 // pred_check_branch
        %149 = sbr.rel (%p147) target = $region24
      $region23: #{tpu_custom_call.1} parent=5 // pred_region
        // Predicated region
        $region25: #{tpu_custom_call.1} parent=23 // pred_check
          %p150 = pneg %p49
        $region26: #{tpu_custom_call.1} parent=23 // pred_check_branch
          %152 = sbr.rel (%p150) target = $region28
        $region27: #{tpu_custom_call.1} parent=23 // pred_region
          %s153 = sand.u32 %s39, 1
          %s154 = scalar_lea.sflag [#allocation3], %s153
          %s155 = sand.u32 %s39, 1
          %s156 = smul.addr %s155, 8
          %s157 = scalar_lea.vmem [#allocation2], %s156
          %s158 = smul.u32 2, %s23
          %s160 = ssub.s32 128, 128
          %161 = vsyncadd %s154, %s160
          %s162 = smul.addr %s22, 2
          %s163 = sadd.s32 %s158, %s162
          %s164 = smul.addr %s163, 64
          %s165 = scalar_lea.hbm %s0, %s164
          %s167 = sshll.u32 %s157, 4
          %s168 = int_to_ptr.vmem [resolvable:$true] %s167
          %170 = dma.hbm_to_vmem [thread:$0]  %s165, 128, %s168, %s154
        $region28: #{tpu_custom_call.1} parent=23 // pred_fallthru
          _
      $region24: #{tpu_custom_call.1} parent=5 // pred_fallthru
        _
      %p171 = scmp.le.s32.totalorder 1, %s15
      %p172 = scmp.lt.s32.totalorder %s15, 3
      %p173 = pnand %p171, %p172
      %p174 = pneg %p173
      // Predicated region
      $region29: #{tpu_custom_call.1} parent=5 // pred_check
        _
      $region30: #{tpu_custom_call.1} parent=5 // pred_check_branch
        %176 = sbr.rel (%p173) target = $region32
      $region31: #{tpu_custom_call.1} parent=5 // pred_region
        %s177 = ssub.s32 %s15, 1
        %s178 = sand.u32 %s42, 1
        %s179 = scalar_lea.sflag [#allocation3], %s178
        %s180 = sand.u32 %s42, 1
        %s181 = smul.addr %s180, 8
        %s182 = scalar_lea.vmem [#allocation2], %s181
        // Predicated region
        $region33: #{tpu_custom_call.1} parent=31 // pred_check
          %p183 = pneg %p55
        $region34: #{tpu_custom_call.1} parent=31 // pred_check_branch
          %185 = sbr.rel (%p183) target = $region36
        $region35: #{tpu_custom_call.1} parent=31 // pred_region
          %186 = dma.done %s179, 128
        $region36: #{tpu_custom_call.1} parent=31 // pred_fallthru
          _
        %s187 = sand.u32 %s42, 1
        %s188 = scalar_lea.sflag [#allocation3], %s187
        %s189 = sand.u32 %s42, 1
        %s190 = smul.addr %s189, 8
        %s191 = scalar_lea.vmem [#allocation2], %s190
        %p192 = pneg %p55
        %p193 = pneg %p52
        %p194 = pneg %p76
        %p195 = pneg %p73
        %p196 = pneg %p97
        %p197 = pneg %p94
        %p198 = pneg %p125
        %p199 = pneg %p122
        %s200 = sand.u32 %s112, 1
        %s201 = scalar_lea.sflag [#allocation4], %s200
        %s202 = sand.u32 %s112, 1
        %s203 = smul.addr %s202, 8
        %s204 = scalar_lea.vmem [#allocation5], %s203
        %s205 = smul.u32 2, %s25
        %s206 = smul.u32 2, %s25
        %v207 = vld [vmem:[%s182] sm:$0xff]
        %v208 = vmul.f32 %v207, %v207
        %v210 = vrot.slane %v207, 5
        %v211 = vrot.slane %v210, 4
        %v213 = vadd.f32 %v207, %v211
        %v215 = vrot.slane %v208, 5
        %v216 = vrot.slane %v215, 4
        %v218 = vadd.f32 %v208, %v216
        %v219 = vrot.slane %v207, 6
        %v220 = vrot.slane %v219, 4
        %v222 = vadd.f32 %v213, %v220
        %v223 = vrot.slane %v208, 6
        %v224 = vrot.slane %v223, 4
        %v226 = vadd.f32 %v218, %v224
        %v227 = vrot.slane %v207, 7
        %v228 = vrot.slane %v227, 4
        %v230 = vadd.f32 %v222, %v228
        %v231 = vrot.slane %v208, 7
        %v232 = vrot.slane %v231, 4
        %v234 = vadd.f32 %v226, %v232
        %v235 = vmul.f32 %v230, 0.25
        %v236 = vmul.f32 %v234, 0.25
        %v237 = vmul.f32 %v235, %v235
        %v238 = vsub.f32 %v236, %v237
        %v239 = vadd.f32 %v238, 1e-06
        %v240 = vrsqrt.pop %v239
        %v242 = vlaneseq
        %v243 = vshrl.u32 %v242, 7
        %v244 = vsub.s32 0, %v243
        %v245 = vrot.slane %v235, %v244
        %v246 = vlaneseq
        %v247 = vshrl.u32 %v246, 7
        %v248 = vsub.s32 4, %v247
        %v249 = vrot.slane %v235, %v248
        %v252 = vlaneseq
        %v253 = vshrl.u32 %v252, 7
        %v254 = vsub.s32 0, %v253
        %v255 = vrot.slane %v245, %v254
        %v256 = vlaneseq
        %v257 = vshrl.u32 %v256, 7
        %v258 = vsub.s32 0, %v257
        %v259 = vrot.slane %v249, %v258
        %v262 = vcombine.low %v255, %v259
        %v264 = vsub.f32 %v207, %v262
        %v266 = vlaneseq
        %v267 = vshrl.u32 %v266, 7
        %v268 = vsub.s32 0, %v267
        %v269 = vrot.slane %v240, %v268
        %v270 = vlaneseq
        %v271 = vshrl.u32 %v270, 7
        %v272 = vsub.s32 4, %v271
        %v273 = vrot.slane %v240, %v272
        %v276 = vlaneseq
        %v277 = vshrl.u32 %v276, 7
        %v278 = vsub.s32 0, %v277
        %v279 = vrot.slane %v269, %v278
        %v280 = vlaneseq
        %v281 = vshrl.u32 %v280, 7
        %v282 = vsub.s32 0, %v281
        %v283 = vrot.slane %v273, %v282
        %v286 = vcombine.low %v279, %v283
        %v288 = vmul.f32 %v264, %v286
        %v289 = vld [vmem:[%s1] sm:$0xf]
        %v290 = vld [vmem:[%s2] sm:$0xf]
        %292 = vset.pattern.permute.xlu0 0
        %293 = vperm.xlu0 %292, %v289
        %v294 = vpop.permute.xlu0 %293
        %v297 = vcombine.high %v288, %v288
        %v299 = vmul.f32 %v294, %v288
        %v300 = vmul.f32 %v294, %v297
        %302 = vset.pattern.permute.xlu0 0
        %303 = vperm.xlu0 %302, %v290
        %v304 = vpop.permute.xlu0 %303
        %v306 = vadd.f32 %v299, %v304
        %v307 = vadd.f32 %v300, %v304
        %v310 = vcombine.low %v306, %v307
        %312 = vst [vmem:[%s204] sm:$0xff] %v310
        %s313 = sand.u32 %s112, 1
        %s314 = scalar_lea.sflag [#allocation4], %s313
        %s315 = sand.u32 %s112, 1
        %s316 = smul.addr %s315, 8
        %s317 = scalar_lea.vmem [#allocation5], %s316
        // Predicated region
        $region37: #{tpu_custom_call.1} parent=31 // pred_check
          %p318 = pneg %p122
        $region38: #{tpu_custom_call.1} parent=31 // pred_check_branch
          %320 = sbr.rel (%p318) target = $region40
        $region39: #{tpu_custom_call.1} parent=31 // pred_region
          %s321 = smul.u32 2, %s25
          %s323 = ssub.s32 128, 128
          %324 = vsyncadd %s314, %s323
          %s325 = smul.addr %s24, 2
          %s326 = sadd.s32 %s321, %s325
          %s327 = smul.addr %s326, 64
          %s328 = scalar_lea.hbm %s3, %s327
          %s330 = sshll.u32 %s317, 4
          %s331 = int_to_ptr.vmem [resolvable:$true] %s330
          %333 = dma.vmem_to_hbm [thread:$0]  %s331, 128, %s328, %s314
        $region40: #{tpu_custom_call.1} parent=31 // pred_fallthru
          _
      $region32: #{tpu_custom_call.1} parent=5 // pred_fallthru
        _
      %p334 = scmp.le.s32.totalorder 2, %s15
      // Predicated region
      $region41: #{tpu_custom_call.1} parent=5 // pred_check
        %p335 = pneg %p334
      $region42: #{tpu_custom_call.1} parent=5 // pred_check_branch
        %337 = sbr.rel (%p335) target = $region44
      $region43: #{tpu_custom_call.1} parent=5 // pred_region
        %s338 = ssub.s32 %s15, 2
        // Predicated region
        $region45: #{tpu_custom_call.1} parent=43 // pred_check
          %p339 = pneg %p128
        $region46: #{tpu_custom_call.1} parent=43 // pred_check_branch
          %341 = sbr.rel (%p339) target = $region48
        $region47: #{tpu_custom_call.1} parent=43 // pred_region
          %s342 = sand.u32 %s113, 1
          %s343 = scalar_lea.sflag [#allocation4], %s342
          %s344 = sand.u32 %s113, 1
          %s345 = smul.addr %s344, 8
          %s346 = scalar_lea.vmem [#allocation5], %s345
          %347 = dma.done %s343, 128
        $region48: #{tpu_custom_call.1} parent=43 // pred_fallthru
          _
      $region44: #{tpu_custom_call.1} parent=5 // pred_fallthru
        _
    $region6: #{tpu_custom_call.1} parent=1 // loop_footer
      %s19 = sadd.s32 1, %s15
    $region7: #{tpu_custom_call.1} parent=1 // loop_footer_branch
      %14 = sbr.rel target = $region3
    $region8: #{tpu_custom_call.1} parent=1 // loop_exit
      _
    %348 = vsyncpa [#allocation3], 1
    %s349 = scalar_lea.sflag [#allocation3], 1
    %350 = vsyncpa %s349, 1
    %351 = vsyncpa [#allocation4], 1
    %s352 = scalar_lea.sflag [#allocation4], 1
    %353 = vsyncpa %s352, 1

</llo_original>
